<compile_context>
chip_gen: v7x
topology: tpu7x:2x2x1
jax: 0.10.0
libtpu: 0.0.40
codegen_flags: <defaults>
</compile_context>

<pallas_src>
import functools

import jax
import jax.numpy as jnp
from jax.experimental import pallas as pl
from jax.experimental.pallas import tpu as pltpu


def conv_stats_kernel(p_ref, w_ref, stats_ref, *, mm_dtype):
    """Stats-only pass: conv tile as (C_out,K)@(K,tn) matmul (f32 accumulation) and
    packed per-channel partial [sum, sum_of_squares] for train-mode BatchNorm.

    y is never written to HBM.  Both grid axes are "parallel" (megacore-friendly).
    The conv bias is omitted: under train-mode BN a per-channel constant shift cancels
    exactly in the normalized output (and keeps zero-padded spatial columns at y == 0).
    """
    y = jnp.dot(w_ref[...].astype(mm_dtype), p_ref[...].astype(mm_dtype),
                preferred_element_type=jnp.float32)            # (C_out, tn) f32
    stats_ref[:, 0:1] = jnp.sum(y, axis=-1, keepdims=True)      # packed in one block:
    stats_ref[:, 1:2] = jnp.sum(y * y, axis=-1, keepdims=True)  # one DMA per step


def conv_bn_act_kernel(p_ref, w_ref, scale_ref, shift_ref, o_ref, *, mm_dtype, act):
    """Fused conv matmul + affine batch-norm (pre-folded scale/shift) + activation.

    Mish z*tanh(softplus(z)) uses the rational identity
        tanh(softplus(z)) = ((1+e^z)^2 - 1) / ((1+e^z)^2 + 1)
    -> one EUP exp + one EUP approximate reciprocal (+ a cheap VPU Newton step) instead
    of exp+log+tanh.  Math stays in f32 (v5e has no bf16 VPU/EUP datapath).
    """
    y = jnp.dot(w_ref[...].astype(mm_dtype), p_ref[...].astype(mm_dtype),
                preferred_element_type=jnp.float32)            # (C_out, tn) f32
    z = y * scale_ref[...] + shift_ref[...]
    if act == 'mish':
        ez = jnp.exp(jnp.minimum(z, 30.0))          # clamp keeps (1+ez)^2 finite in f32
        t = (1.0 + ez) * (1.0 + ez)
        denom = t + 1.0
        r = pl.reciprocal(denom, approx=True)
        r = r * (2.0 - denom * r)                   # one Newton step -> ~f32 accurate
        out = z * jnp.where(z > 20.0, 1.0, (t - 1.0) * r)   # mish(z) -> z for large z
    elif act == 'leakyrelu':
        out = jnp.where(z >= 0.0, z, 0.01 * z)
    elif act == 'relu':
        out = jnp.maximum(z, 0.0)
    else:
        raise ValueError(f"{act} activation not supported")
    o_ref[...] = out.astype(o_ref.dtype)


def _vmem_budgets():
    """Generation-aware (v5e/v6e: 128 MiB, v7x: 64 MiB VMEM) block budget / scoped limit."""
    try:
        cap = int(getattr(pltpu.get_tpu_info(), "vmem_capacity_bytes", 0)) or (64 << 20)
    except Exception:
        cap = 64 << 20                       # conservative (v7x-sized) fallback
    vmem_limit = min((cap * 3) // 4, 100 << 20)   # 48 MiB on v7x, 96 MiB on v5e/v6e
    block_budget = min(cap // 3, 48 << 20)        # ~21 MiB on v7x, ~42 MiB on v5e/v6e
    return block_budget, vmem_limit


def _pick_spatial_tile(hw, bytes_per_lane, block_budget_bytes, fixed_bytes):
    """Pick (tn, hw_pad): tn a multiple of 128 dividing hw_pad, fitting the block budget.

    Prefers a tile that divides the 128-rounded extent exactly (no extra padding) as long
    as it stays within 2x of the budget-sized tile; otherwise pads hw up to a tile multiple
    (never falls back to one giant full-extent block)."""
    hw128 = -(-hw // 128) * 128
    avail = max(block_budget_bytes - fixed_bytes, 128 * bytes_per_lane)
    budget_lanes = max(128, (avail // max(bytes_per_lane, 1)) // 128 * 128)
    tn = min(hw128, budget_lanes)
    t = tn
    while t >= max(128, tn // 2):
        if hw128 % t == 0:
            return t, hw128
        t -= 128
    hw_pad = -(-hw128 // tn) * tn
    return tn, hw_pad


def base_block_forward(x, conv_w, conv_b, gamma, beta, *, kernel_size=1, stride=1,
                       padding=0, eps=1e-5, act_fn='mish', matmul_dtype=jnp.bfloat16):
    """Forward pass of BaseBlock (Conv2d -> BatchNorm2d(train batch stats) -> act) on TPU.

    conv_b is accepted for API parity but unused: with train-mode batch-norm the conv bias
    shifts y and its batch mean identically, so it cancels exactly in the output.
    """
    del conv_b
    N, C_in, H, W = x.shape
    C_out = conv_w.shape[0]
    k = kernel_size

    if k == 1 and stride == 1 and padding == 0:
        # BaseBlock default (1x1 conv): patches == x up to a free reshape; no im2col op
        # and no dtype-cast pass over the largest tensor.
        H_out, W_out = H, W
        K = C_in
        patches = x.reshape(N, C_in, H * W)
    else:
        # TODO(synk): implicit in-kernel im2col (halo BlockSpecs / manual DMA + a K grid
        # axis with f32 VMEM accumulator) would avoid materializing this k^2-sized
        # patches tensor in HBM for non-1x1 convs.
        patches = jax.lax.conv_general_dilated_patches(
            x, filter_shape=(k, k), window_strides=(stride, stride),
            padding=[(padding, padding), (padding, padding)],
            dimension_numbers=('NCHW', 'OIHW', 'NCHW'))
        _, K, H_out, W_out = patches.shape      # feature order (C_in, kh, kw) == OIHW flat
        patches = patches.reshape(N, K, H_out * W_out)

    HW = H_out * W_out
    M = N * HW                                   # true element count for batch stats
    mm_dtype = jnp.dtype(matmul_dtype)
    out_dtype = x.dtype
    w2 = conv_w.reshape(C_out, K)                # kept in param dtype; cast in-kernel

    in_it = jnp.dtype(patches.dtype).itemsize
    out_it = jnp.dtype(out_dtype).itemsize
    mm_it = mm_dtype.itemsize
    # Per-lane VMEM bytes (max over both kernels): double-buffered patches block,
    # double-buffered output block, in-kernel casted copies + f32 temporaries.
    bytes_per_lane = 2 * in_it * K + 2 * out_it * C_out + mm_it * (K + C_out) + 8 * C_out
    fixed_bytes = 2 * in_it * C_out * K + (1 << 20)   # weights block (+ slack)

    block_budget, vmem_limit = _vmem_budgets()
    tn, HW_pad = _pick_spatial_tile(HW, bytes_per_lane, block_budget, fixed_bytes)
    nt = HW_pad // tn
    if HW_pad != HW:
        # Zero-padded spatial columns give y == 0 (no conv bias), so sums/ssqs are exact;
        # the pad is sliced off before the final reshape.
        patches = jnp.pad(patches, ((0, 0), (0, 0), (0, HW_pad - HW)))

    grid = (N, nt)
    cparams = pltpu.CompilerParams(
        dimension_semantics=("parallel", "parallel"),
        vmem_limit_bytes=vmem_limit)

    # ---- pass 1: stats only (no intermediate y written to HBM) ----
    stats = pl.pallas_call(
        functools.partial(conv_stats_kernel, mm_dtype=mm_dtype),
        out_shape=jax.ShapeDtypeStruct((N, nt, C_out, 2), jnp.float32),
        grid_spec=pltpu.PrefetchScalarGridSpec(
            num_scalar_prefetch=0, grid=grid,
            in_specs=[pl.BlockSpec((None, K, tn), lambda n, j: (n, 0, j)),
                      pl.BlockSpec((C_out, K), lambda n, j: (0, 0))],
            out_specs=pl.BlockSpec((None, None, C_out, 2), lambda n, j: (n, j, 0, 0))),
        compiler_params=cparams,
    )(patches, w2)

    # Tiny cross-tile reduction + fold of train-mode BN (biased batch variance, as in
    # PyTorch's forward) into a per-channel scale/shift, in plain JAX.
    # TODO(synk): single-pass E[y^2]-mean^2 can lose precision for huge M / large-mean
    # channels; switch to per-tile (count, mean, M2) combination if that ever matters.
    s_tot = jnp.sum(stats[..., 0], axis=(0, 1))            # (C_out,)
    ss_tot = jnp.sum(stats[..., 1], axis=(0, 1))
    mean = s_tot / M
    var = jnp.maximum(ss_tot / M - mean * mean, 0.0)       # clamp round-off before rsqrt
    scale = (gamma.astype(jnp.float32) / jnp.sqrt(var + eps)).reshape(C_out, 1)
    shift = beta.astype(jnp.float32).reshape(C_out, 1) - mean.reshape(C_out, 1) * scale

    # ---- pass 2: fused conv matmul + BN affine + activation (only final output written) ----
    out3 = pl.pallas_call(
        functools.partial(conv_bn_act_kernel, mm_dtype=mm_dtype, act=act_fn.lower()),
        out_shape=jax.ShapeDtypeStruct((N, C_out, HW_pad), out_dtype),
        grid_spec=pltpu.PrefetchScalarGridSpec(
            num_scalar_prefetch=0, grid=grid,
            in_specs=[pl.BlockSpec((None, K, tn), lambda n, j: (n, 0, j)),
                      pl.BlockSpec((C_out, K), lambda n, j: (0, 0)),
                      pl.BlockSpec((C_out, 1), lambda n, j: (0, 0)),
                      pl.BlockSpec((C_out, 1), lambda n, j: (0, 0))],
            out_specs=pl.BlockSpec((None, C_out, tn), lambda n, j: (n, 0, j))),
        compiler_params=cparams,
    )(patches, w2, scale, shift)

    if HW_pad != HW:
        out3 = out3[:, :, :HW]
    # Back to NCHW with a free reshape (no transpose: spatial was already minor).
    return out3.reshape(N, C_out, H_out, W_out)


def reference_forward(x, conv_w, conv_b, gamma, beta, *, stride=1, padding=0, eps=1e-5):
    y = jax.lax.conv_general_dilated(
        x.astype(jnp.float32), conv_w.astype(jnp.float32),
        (stride, stride), [(padding, padding), (padding, padding)],
        dimension_numbers=('NCHW', 'OIHW', 'NCHW')) + conv_b.reshape(1, -1, 1, 1)
    mean = y.mean(axis=(0, 2, 3), keepdims=True)
    var = y.var(axis=(0, 2, 3), keepdims=True)             # biased, as in BN forward
    z = (y - mean) / jnp.sqrt(var + eps)
    z = z * gamma.reshape(1, -1, 1, 1) + beta.reshape(1, -1, 1, 1)
    return z * jnp.tanh(jax.nn.softplus(z))                # Mish


if __name__ == "__main__":
    key = jax.random.PRNGKey(0)
    k_x, k_w, k_b, k_g, k_be, k_w3, k_b3 = jax.random.split(key, 7)

    N, C_in, H, W = 2, 4, 16, 16
    C_out = 8

    x = jax.random.normal(k_x, (N, C_in, H, W), dtype=jnp.float32)
    gamma = 1.0 + 0.1 * jax.random.normal(k_g, (C_out,), dtype=jnp.float32)
    beta = 0.1 * jax.random.normal(k_be, (C_out,), dtype=jnp.float32)

    # --- BaseBlock defaults: 1x1 conv, stride 1, pad 0, Mish ---
    conv_w = jax.random.normal(k_w, (C_out, C_in, 1, 1), dtype=jnp.float32) * 0.1
    conv_b = jax.random.normal(k_b, (C_out,), dtype=jnp.float32) * 0.1
    ref = reference_forward(x, conv_w, conv_b, gamma, beta, stride=1, padding=0)

    out_f32 = jax.block_until_ready(base_block_forward(
        x, conv_w, conv_b, gamma, beta, kernel_size=1, stride=1, padding=0,
        matmul_dtype=jnp.float32))
    assert out_f32.shape == ref.shape == (N, C_out, H, W)
    assert jnp.allclose(out_f32, ref, atol=1e-3, rtol=1e-3), "1x1 f32 path mismatch"

    # bf16 matmul path (halves input-side MXU operand width, full-rate MXU): loose check.
    out_bf16 = jax.block_until_ready(base_block_forward(
        x, conv_w, conv_b, gamma, beta, kernel_size=1, stride=1, padding=0,
        matmul_dtype=jnp.bfloat16))
    assert out_bf16.shape == ref.shape
    assert jnp.allclose(out_bf16, ref, atol=5e-2, rtol=5e-2), "1x1 bf16 path mismatch"

    # --- 3x3 conv path (im2col patches + same fused kernels) ---
    conv_w3 = jax.random.normal(k_w3, (C_out, C_in, 3, 3), dtype=jnp.float32) * 0.1
    conv_b3 = jax.random.normal(k_b3, (C_out,), dtype=jnp.float32) * 0.1
    ref3 = reference_forward(x, conv_w3, conv_b3, gamma, beta, stride=1, padding=1)
    out3 = jax.block_until_ready(base_block_forward(
        x, conv_w3, conv_b3, gamma, beta, kernel_size=3, stride=1, padding=1,
        matmul_dtype=jnp.float32))
    assert out3.shape == ref3.shape == (N, C_out, H, W)
    assert jnp.allclose(out3, ref3, atol=1e-3, rtol=1e-3), "3x3 f32 path mismatch"

    print("KERNEL_OK")
</pallas_src>

<mosaic_0001>
module attributes {stable_mosaic.version = 11 : i64} {
  func.func @conv_stats_kernel(%arg0: i32, %arg1: i32, %arg2: memref<1x4x256xf32, #tpu.memory_space<vmem>>, %arg3: memref<8x4xf32, #tpu.memory_space<vmem>>, %arg4: memref<1x1x8x2xf32, #tpu.memory_space<vmem>>) attributes {dimension_semantics = [#tpu.dimension_semantics<parallel>, #tpu.dimension_semantics<parallel>], iteration_bounds = array<i64: 2, 1>, scalar_prefetch = 0 : i64, scratch_operands = 0 : i64, tpu.core_type = #tpu.core_type<tc>, window_params = [{transform_indices = @transform_0, window_bounds = array<i64: 1, 4, 256>}, {pipeline_mode = #tpu.pipeline_mode<synchronous>, transform_indices = @transform_1, window_bounds = array<i64: 8, 4>}, {transform_indices = @transform_2, window_bounds = array<i64: 1, 1, 8, 2>}]} {
    %c0 = arith.constant 0 : index
    %c0_0 = arith.constant 0 : index
    %0 = vector.load %arg3[%c0, %c0_0] : memref<8x4xf32, #tpu.memory_space<vmem>>, vector<8x4xf32>
    %c0_1 = arith.constant 0 : index
    %c0_2 = arith.constant 0 : index
    %c0_3 = arith.constant 0 : index
    %1 = vector.load %arg2[%c0_1, %c0_2, %c0_3] : memref<1x4x256xf32, #tpu.memory_space<vmem>>, vector<1x4x256xf32>
    %2 = vector.shape_cast %1 : vector<1x4x256xf32> to vector<4x256xf32>
    %cst = arith.constant dense<0.000000e+00> : vector<8x256xf32>
    %3 = tpu.matmul %0, %2, %cst {dimension_numbers = #tpu.dot_dimension_numbers<[1], [0], [0], [1], [0, 0, 1, 1], [], []>} : vector<8x4xf32>, vector<4x256xf32>, vector<8x256xf32> -> vector<8x256xf32>
    %cst_4 = arith.constant dense<0.000000e+00> : vector<8xf32>
    %4 = vector.multi_reduction <add>, %3, %cst_4 [1] : vector<8x256xf32> to vector<8xf32>
    %5 = vector.shape_cast %4 : vector<8xf32> to vector<8x1xf32>
    %c0_5 = arith.constant 0 : index
    %c0_6 = arith.constant 0 : index
    %c0_7 = arith.constant 0 : index
    %c0_8 = arith.constant 0 : index
    %6 = vector.load %arg4[%c0_5, %c0_6, %c0_7, %c0_8] : memref<1x1x8x2xf32, #tpu.memory_space<vmem>>, vector<1x1x8x1xf32>
    %7 = vector.shape_cast %6 : vector<1x1x8x1xf32> to vector<8x1xf32>
    %8 = vector.shape_cast %5 : vector<8x1xf32> to vector<1x1x8x1xf32>
    tpu.vector_store %arg4[%c0_5, %c0_6, %c0_7, %c0_8], %8 {strides = array<i32>} : memref<1x1x8x2xf32, #tpu.memory_space<vmem>>, vector<1x1x8x1xf32>,
    %9 = arith.mulf %3, %3 : vector<8x256xf32>
    %cst_9 = arith.constant dense<0.000000e+00> : vector<8xf32>
    %10 = vector.multi_reduction <add>, %9, %cst_9 [1] : vector<8x256xf32> to vector<8xf32>
    %11 = vector.shape_cast %10 : vector<8xf32> to vector<8x1xf32>
    %c0_10 = arith.constant 0 : index
    %c0_11 = arith.constant 0 : index
    %c0_12 = arith.constant 0 : index
    %c1 = arith.constant 1 : index
    %12 = vector.load %arg4[%c0_10, %c0_11, %c0_12, %c1] : memref<1x1x8x2xf32, #tpu.memory_space<vmem>>, vector<1x1x8x1xf32>
    %13 = vector.shape_cast %12 : vector<1x1x8x1xf32> to vector<8x1xf32>
    %14 = vector.shape_cast %11 : vector<8x1xf32> to vector<1x1x8x1xf32>
    tpu.vector_store %arg4[%c0_10, %c0_11, %c0_12, %c1], %14 {strides = array<i32>} : memref<1x1x8x2xf32, #tpu.memory_space<vmem>>, vector<1x1x8x1xf32>,
    return
  }
  func.func @transform_0(%arg0: i32, %arg1: i32) -> (i32, i32, i32) {
    %c0_i32 = arith.constant 0 : i32
    %c0_i32_0 = arith.constant 0 : i32
    return %arg0, %c0_i32, %arg1 : i32, i32, i32
  }
  func.func @transform_1(%arg0: i32, %arg1: i32) -> (i32, i32) {
    %c0_i32 = arith.constant 0 : i32
    %c0_i32_0 = arith.constant 0 : i32
    %c0_i32_1 = arith.constant 0 : i32
    return %c0_i32, %c0_i32_0 : i32, i32
  }
  func.func @transform_2(%arg0: i32, %arg1: i32) -> (i32, i32, i32, i32) {
    %c0_i32 = arith.constant 0 : i32
    %c0_i32_0 = arith.constant 0 : i32
    %c0_i32_1 = arith.constant 0 : i32
    return %arg0, %arg1, %c0_i32, %c0_i32_0 : i32, i32, i32, i32
  }
}

</mosaic_0001>

<llo_original>
// kernel: tpu_custom_call.1
$region0: #{tpu_custom_call.1}
  #allocation0 [shape = 'u32[]', space=smem, size = 0x4, offset = 0x4, fixed_abs, tag = 'smem constant byte address 0x4 - core index']
  #allocation1 [shape = 'u32[144,128]{1,0:T(1,128)}', space=vmem, size = 0x12000, scoped, tag = 'internal scratch']
  %s0 = inlined_call_operand.hbm [shape: f32[2,4,256], index: 0, kind: input, shape index: {}]
  %s1 = inlined_call_operand.vmem [shape: f32[8,4], index: 1, kind: input, shape index: {}]
  %s2 = inlined_call_operand.vmem [shape: f32[2,1,8,2], index: 2, kind: output, shape index: {}]
  %s3 = sld [smem:[#allocation0]]
  $region45: #{tpu_custom_call.1} parent=0
    _
  %s5 = ssub.s32 1, %s3
  %s6 = scalar_select 0, %s5, %s3
  $region1: #{tpu_custom_call.1} parent=0
    #allocation2 [shape = 'u8[8192]{0}', space=vmem, size = 0x2000, scoped, tag = 'input window, operand 0']
    #allocation3 [shape = 's32[2]{0}', space=sflag, size = 0x8, scoped, tag = 'scoped memory for tpu_custom_call.1']
    %7 = vsyncpa [#allocation3], 0
    %s8 = scalar_lea.sflag [#allocation3], 1
    %9 = vsyncpa %s8, 0
    loop: start=0, step=1, limit=4
    $region2: #{tpu_custom_call.1} parent=1 // loop_pre_header
      _
    $region3: #{tpu_custom_call.1} parent=1 // loop_header
      %s11 = sphi 0, %s15
      %p12 = scmp.ge.s32.totalorder %s11, 4
      %s18 = sphi 0, %s30
      %s19 = sphi 0, %s26
      %s20 = sphi 0, %s18
      %s21 = sphi 0, %s19
      %s22 = sphi 0, %s20
      %s23 = sphi 0, %s21
      %s35 = sphi 0, %s37
      %s38 = sphi 0, %s35
      %s39 = sphi 0, %s38
      %s55 = sphi 0, %s39
      %s59 = sphi 0, %s59
      %s61 = sphi 0, %s59
      %s62 = sphi 0, %s61
      %s76 = sphi 0, %s62
      %s84 = sphi 0, %s86
      %s87 = sphi 0, %s84
      %s88 = sphi 0, %s87
      %s104 = sphi 0, %s88
    $region4: #{tpu_custom_call.1} parent=1 // loop_header_branch
      %14 = sbr.rel (%p12) target = $region8
    $region5: #{tpu_custom_call.1} parent=1 // loop_body
      %s16 = ssub.s32 %s11, 1
      %s17 = ssub.s32 %s11, 2
      %s24 = sadd.s32 1, %s19
      %p25 = scmp.ge.s32.totalorder %s24, 1
      %s26 = scalar_select %p25, 0, %s24
      %s27 = sadd.s32 1, %s18
      %s28 = scalar_select %p25, %s27, %s18
      %p29 = scmp.ge.s32.totalorder %s28, 2
      %s30 = scalar_select %p29, 0, %s28
      %s31 = ssub.s32 %s18, %s30
      %s32 = ssub.s32 %s19, %s26
      %s33 = sor.u32 %s31, %s32
      %p34 = scmp.eq.s32.totalorder %s33, 0
      %s36 = sadd.s32 %s35, 1
      %s37 = scalar_select %p34, %s35, %s36
      %p40 = pneg %p34
      %p41 = scmp.eq.s32.totalorder %s11, 1
      %p42 = por %p40, %p41
      %p43 = scmp.ne.s32.totalorder %s35, %s38
      %p44 = scmp.eq.s32.totalorder %s11, 0
      %p45 = por %p43, %p44
      %p46 = scmp.ne.s32.totalorder %s35, %s38
      %p47 = scmp.eq.s32.totalorder %s16, 1
      %p48 = por %p46, %p47
      %p49 = scmp.ne.s32.totalorder %s38, %s39
      %p50 = scmp.eq.s32.totalorder %s16, 0
      %p51 = por %p49, %p50
      %p52 = scmp.ne.s32.totalorder %s38, %s39
      %p53 = scmp.eq.s32.totalorder %s17, 1
      %p54 = por %p52, %p53
      %p56 = scmp.ne.s32.totalorder %s39, %s55
      %p57 = scmp.eq.s32.totalorder %s17, 0
      %p58 = por %p56, %p57
      %s60 = sadd.s32 %s59, 1
      %p63 = scmp.eq.s32.totalorder %s11, 1
      %p64 = scmp.ne.s32.totalorder %s59, %s61
      %p65 = scmp.eq.s32.totalorder %s11, 0
      %p66 = por %p64, %p65
      %p67 = scmp.ne.s32.totalorder %s59, %s61
      %p68 = scmp.eq.s32.totalorder %s16, 1
      %p69 = por %p67, %p68
      %p70 = scmp.ne.s32.totalorder %s61, %s62
      %p71 = scmp.eq.s32.totalorder %s16, 0
      %p72 = por %p70, %p71
      %p73 = scmp.ne.s32.totalorder %s61, %s62
      %p74 = scmp.eq.s32.totalorder %s17, 1
      %p75 = por %p73, %p74
      %p77 = scmp.ne.s32.totalorder %s62, %s76
      %p78 = scmp.eq.s32.totalorder %s17, 0
      %p79 = por %p77, %p78
      %s80 = ssub.s32 %s18, %s30
      %s81 = ssub.s32 %s19, %s26
      %s82 = sor.u32 %s80, %s81
      %p83 = scmp.eq.s32.totalorder %s82, 0
      %s85 = sadd.s32 %s84, 1
      %s86 = scalar_select %p83, %s84, %s85
      %p89 = pneg %p83
      %p90 = scmp.eq.s32.totalorder %s11, 1
      %p91 = por %p89, %p90
      %p92 = scmp.ne.s32.totalorder %s84, %s87
      %p93 = scmp.eq.s32.totalorder %s11, 0
      %p94 = por %p92, %p93
      %p95 = scmp.ne.s32.totalorder %s84, %s87
      %p96 = scmp.eq.s32.totalorder %s16, 1
      %p97 = por %p95, %p96
      %p98 = scmp.ne.s32.totalorder %s87, %s88
      %p99 = scmp.eq.s32.totalorder %s16, 0
      %p100 = por %p98, %p99
      %p101 = scmp.ne.s32.totalorder %s87, %s88
      %p102 = scmp.eq.s32.totalorder %s17, 1
      %p103 = por %p101, %p102
      %p105 = scmp.ne.s32.totalorder %s88, %s104
      %p106 = scmp.eq.s32.totalorder %s17, 0
      %p107 = por %p105, %p106
      %p108 = scmp.le.s32.totalorder 1, %s11
      %p109 = scmp.lt.s32.totalorder %s11, 3
      %p110 = pnand %p108, %p109
      %p111 = pneg %p110
      // Predicated region
      $region9: #{tpu_custom_call.1} parent=5 // pred_check
        _
      $region10: #{tpu_custom_call.1} parent=5 // pred_check_branch
        %113 = sbr.rel (%p110) target = $region12
      $region11: #{tpu_custom_call.1} parent=5 // pred_region
        %s114 = ssub.s32 %s11, 1
        // Predicated region
        $region13: #{tpu_custom_call.1} parent=11 // pred_check
          %p115 = pneg %p72
        $region14: #{tpu_custom_call.1} parent=11 // pred_check_branch
          %117 = sbr.rel (%p115) target = $region16
        $region15: #{tpu_custom_call.1} parent=11 // pred_region
          _
        $region16: #{tpu_custom_call.1} parent=11 // pred_fallthru
          _
      $region12: #{tpu_custom_call.1} parent=5 // pred_fallthru
        _
      %p118 = scmp.lt.s32.totalorder %s11, 2
      // Predicated region
      $region17: #{tpu_custom_call.1} parent=5 // pred_check
        %p119 = pneg %p118
      $region18: #{tpu_custom_call.1} parent=5 // pred_check_branch
        %121 = sbr.rel (%p119) target = $region20
      $region19: #{tpu_custom_call.1} parent=5 // pred_region
        // Predicated region
        $region21: #{tpu_custom_call.1} parent=19 // pred_check
          %p122 = pneg %p45
        $region22: #{tpu_custom_call.1} parent=19 // pred_check_branch
          %124 = sbr.rel (%p122) target = $region24
        $region23: #{tpu_custom_call.1} parent=19 // pred_region
          %s125 = sand.u32 %s35, 1
          %s126 = scalar_lea.sflag [#allocation3], %s125
          %s127 = sand.u32 %s35, 1
          %s128 = smul.addr %s127, 8
          %s129 = scalar_lea.vmem [#allocation2], %s128
          %s130 = smul.u32 2, %s19
          %s132 = ssub.s32 128, 128
          %133 = vsyncadd %s126, %s132
          %s134 = smul.addr %s18, 2
          %s135 = sadd.s32 %s130, %s134
          %s136 = smul.addr %s135, 64
          %s137 = scalar_lea.hbm %s0, %s136
          %s139 = sshll.u32 %s129, 4
          %s140 = int_to_ptr.vmem [resolvable:$true] %s139
          %142 = dma.hbm_to_vmem [thread:$0]  %s137, 128, %s140, %s126
        $region24: #{tpu_custom_call.1} parent=19 // pred_fallthru
          _
      $region20: #{tpu_custom_call.1} parent=5 // pred_fallthru
        _
      %p143 = scmp.le.s32.totalorder 1, %s11
      %p144 = scmp.lt.s32.totalorder %s11, 3
      %p145 = pnand %p143, %p144
      %p146 = pneg %p145
      // Predicated region
      $region25: #{tpu_custom_call.1} parent=5 // pred_check
        _
      $region26: #{tpu_custom_call.1} parent=5 // pred_check_branch
        %148 = sbr.rel (%p145) target = $region28
      $region27: #{tpu_custom_call.1} parent=5 // pred_region
        %s149 = ssub.s32 %s11, 1
        %s150 = sand.u32 %s38, 1
        %s151 = scalar_lea.sflag [#allocation3], %s150
        %s152 = sand.u32 %s38, 1
        %s153 = smul.addr %s152, 8
        %s154 = scalar_lea.vmem [#allocation2], %s153
        // Predicated region
        $region29: #{tpu_custom_call.1} parent=27 // pred_check
          %p155 = pneg %p51
        $region30: #{tpu_custom_call.1} parent=27 // pred_check_branch
          %157 = sbr.rel (%p155) target = $region32
        $region31: #{tpu_custom_call.1} parent=27 // pred_region
          %158 = dma.done %s151, 128
        $region32: #{tpu_custom_call.1} parent=27 // pred_fallthru
          _
        %s159 = sand.u32 %s38, 1
        %s160 = scalar_lea.sflag [#allocation3], %s159
        %s161 = sand.u32 %s38, 1
        %s162 = smul.addr %s161, 8
        %s163 = scalar_lea.vmem [#allocation2], %s162
        %p164 = pneg %p51
        %p165 = pneg %p48
        %p166 = pneg %p72
        %p167 = pneg %p69
        %p168 = pneg %p100
        %p169 = pneg %p97
        %p170 = scmp.lt.s32.totalorder %s20, 1
        %s171 = scalar_select %p170, %s20, 1
        %p172 = scmp.lt.s32.totalorder %s21, 0
        %s173 = scalar_select %p172, %s21, 0
        %s174 = sadd.s32 %s173, %s171
        %s175 = smul.addr %s174, 8
        %s176 = scalar_lea.vmem %s2, %s175
        %s177 = smul.u32 2, %s21
        %p178 = scmp.lt.s32.totalorder %s20, 1
        %s179 = scalar_select %p178, %s20, 1
        %p180 = scmp.lt.s32.totalorder %s21, 0
        %s181 = scalar_select %p180, %s21, 0
        %s182 = sadd.s32 %s181, %s179
        %s183 = smul.addr %s182, 8
        %s184 = scalar_lea.vmem %s2, %s183
        %v185 = vld [vmem:[%s1] sm:$0xff]
        %v186 = vld [vmem:[%s154] sm:$0xff]
        %v188 = vcombine.high %v186, %v186
        %vm189 = vcmask 31744
        %v191 = vsel %vm189, %v185, 0
        %vm193 = vcmask 1043456
        %v194 = vsel %vm193, %v186, 0
        %v196 = vsel %vm193, %v188, 0
        %198 = vmatprep.subr.mxu0 %v196
        %199 = vmatpush1.msra.mxu0 %v194
        %200 = vmatprep.subr.mxu0 0.0
        %201 = vmatpush1.msra.mxu0 0.0
        %202 = vmatprep.subr.mxu0 0.0
        %203 = vmatpush1.msra.mxu0 0.0
        %204 = vmatprep.subr.mxu0 0.0
        %205 = vmatpush1.msra.mxu0 0.0
        %206 = vmatprep.subr.mxu0 0.0
        %207 = vmatpush1.msra.mxu0 0.0
        %208 = vmatprep.subr.mxu0 0.0
        %209 = vmatpush1.msra.mxu0 0.0
        %210 = vmatprep.subr.mxu0 0.0
        %211 = vmatpush1.msra.mxu0 0.0
        %212 = vmatprep.subr.mxu0 0.0
        %213 = vmatpush1.msra.mxu0 0.0
        %214 = vmatprep.subr.mxu0 0.0
        %215 = vmatpush1.msra.mxu0 0.0
        %216 = vmatprep.subr.mxu0 0.0
        %217 = vmatpush1.msra.mxu0 0.0
        %218 = vmatprep.subr.mxu0 0.0
        %219 = vmatpush1.msra.mxu0 0.0
        %220 = vmatprep.subr.mxu0 0.0
        %221 = vmatpush1.msra.mxu0 0.0
        %222 = vmatprep.subr.mxu0 0.0
        %223 = vmatpush1.msra.mxu0 0.0
        %224 = vmatprep.subr.mxu0 0.0
        %225 = vmatpush1.msra.mxu0 0.0
        %226 = vmatprep.subr.mxu0 0.0
        %227 = vmatpush1.msra.mxu0 0.0
        %228 = vmatprep.subr.mxu0 0.0
        %229 = vmatpush1.msra.mxu0 0.0
        %230 = vmatprep.subr.mxu0 0.0
        %231 = vmatpush1.msra.mxu0 0.0
        %232 = vmatprep.subr.mxu0 0.0
        %233 = vmatpush1.msra.mxu0 0.0
        %234 = vmatprep.subr.mxu0 0.0
        %235 = vmatpush1.msra.mxu0 0.0
        %236 = vmatprep.subr.mxu0 0.0
        %237 = vmatpush1.msra.mxu0 0.0
        %238 = vmatprep.subr.mxu0 0.0
        %239 = vmatpush1.msra.mxu0 0.0
        %240 = vmatprep.subr.mxu0 0.0
        %241 = vmatpush1.msra.mxu0 0.0
        %242 = vmatprep.subr.mxu0 0.0
        %243 = vmatpush1.msra.mxu0 0.0
        %244 = vmatprep.subr.mxu0 0.0
        %245 = vmatpush1.msra.mxu0 0.0
        %246 = vmatprep.subr.mxu0 0.0
        %247 = vmatpush1.msra.mxu0 0.0
        %248 = vmatprep.subr.mxu0 0.0
        %249 = vmatpush1.msra.mxu0 0.0
        %250 = vmatprep.subr.mxu0 0.0
        %251 = vmatpush1.msra.mxu0 0.0
        %252 = vmatprep.subr.mxu0 0.0
        %253 = vmatpush1.msra.mxu0 0.0
        %254 = vmatprep.subr.mxu0 0.0
        %255 = vmatpush1.msra.mxu0 0.0
        %256 = vmatprep.subr.mxu0 0.0
        %257 = vmatpush1.msra.mxu0 0.0
        %258 = vmatprep.subr.mxu0 0.0
        %259 = vmatpush1.msra.mxu0 0.0
        %260 = vmatprep.subr.mxu0 0.0
        %261 = vmatpush1.msra.mxu0 0.0
        %262 = vmatprep.mubr.f32.mxu0 0.0
        %263 = vmatmul.mubr.f32.gmra.mrb[0].mxu0 %v191
        %v264 = vpop.f32.mrb[0].mxu0
        %v265 = vadd.f32 0.0, %v264
        %v266 = vpop.f32.mrb[0].mxu0
        %v267 = vadd.f32 0.0, %v266
        %268 = vdwg.mxu0
        %v269 = vadd.f32 %v265, %v267
        %270 = vadd.xlane.f32.xlu0 %v269
        %v271 = vpop.xlane.xlu0 %270
        %vm272 = vcmask 7168
        %273 = vst.msk [vmem:[%s184] sm:$0xff] %vm272, %v271
        %v274 = vmul.f32 %v265, %v265
        %v275 = vmul.f32 %v267, %v267
        %v276 = vadd.f32 %v274, %v275
        %277 = vadd.xlane.f32.xlu0 %v276
        %v278 = vpop.xlane.xlu0 %277
        %vm279 = vcmask 15368
        %280 = vst.msk [vmem:[%s184] sm:$0xff] %vm279, %v278
        %p281 = scmp.lt.s32.totalorder %s20, 1
        %s282 = scalar_select %p281, %s20, 1
        %p283 = scmp.lt.s32.totalorder %s21, 0
        %s284 = scalar_select %p283, %s21, 0
        %s285 = sadd.s32 %s284, %s282
        %s286 = smul.addr %s285, 8
        %s287 = scalar_lea.vmem %s2, %s286
        // Predicated region
        $region33: #{tpu_custom_call.1} parent=27 // pred_check
          %p288 = pneg %p97
        $region34: #{tpu_custom_call.1} parent=27 // pred_check_branch
          %290 = sbr.rel (%p288) target = $region36
        $region35: #{tpu_custom_call.1} parent=27 // pred_region
          _
        $region36: #{tpu_custom_call.1} parent=27 // pred_fallthru
          _
      $region28: #{tpu_custom_call.1} parent=5 // pred_fallthru
        _
      %p291 = scmp.le.s32.totalorder 2, %s11
      // Predicated region
      $region37: #{tpu_custom_call.1} parent=5 // pred_check
        %p292 = pneg %p291
      $region38: #{tpu_custom_call.1} parent=5 // pred_check_branch
        %294 = sbr.rel (%p292) target = $region40
      $region39: #{tpu_custom_call.1} parent=5 // pred_region
        %s295 = ssub.s32 %s11, 2
        // Predicated region
        $region41: #{tpu_custom_call.1} parent=39 // pred_check
          %p296 = pneg %p103
        $region42: #{tpu_custom_call.1} parent=39 // pred_check_branch
          %298 = sbr.rel (%p296) target = $region44
        $region43: #{tpu_custom_call.1} parent=39 // pred_region
          %p299 = scmp.lt.s32.totalorder %s22, 1
          %s300 = scalar_select %p299, %s22, 1
          %p301 = scmp.lt.s32.totalorder %s23, 0
          %s302 = scalar_select %p301, %s23, 0
          %s303 = sadd.s32 %s302, %s300
          %s304 = smul.addr %s303, 8
          %s305 = scalar_lea.vmem %s2, %s304
        $region44: #{tpu_custom_call.1} parent=39 // pred_fallthru
          _
      $region40: #{tpu_custom_call.1} parent=5 // pred_fallthru
        _
    $region6: #{tpu_custom_call.1} parent=1 // loop_footer
      %s15 = sadd.s32 1, %s11
    $region7: #{tpu_custom_call.1} parent=1 // loop_footer_branch
      %10 = sbr.rel target = $region3
    $region8: #{tpu_custom_call.1} parent=1 // loop_exit
      _
    %306 = vsyncpa [#allocation3], 1
    %s307 = scalar_lea.sflag [#allocation3], 1
    %308 = vsyncpa %s307, 1

</llo_original>
